<compile_context>
chip_gen: v7x
topology: tpu7x:2x2x1
jax: 0.10.0
libtpu: 0.0.40
codegen_flags: <defaults>
</compile_context>

<pallas_src>
import functools
import math

import numpy as np
import jax
import jax.numpy as jnp
from jax import lax
from jax.experimental import pallas as pl
from jax.experimental.pallas import tpu as pltpu

_EPS = 1e-12  # matches F.normalize eps


def _proxy_anchor_kernel(emb_ref, prx_ref, tgt_ref, out_ref,
                         row_scale_ref, acc_ref,
                         *, alpha, delta, n_classes, class_tile, tiles_per_split):
    p = pl.program_id(0)          # class-range split (parallel across TensorCores)
    k = pl.program_id(1)          # class tile within the split (reduction axis)
    tile_idx = p * tiles_per_split + k
    col_base = tile_idx * class_tile

    B, D = emb_ref.shape

    # --- first tile of each split: row norms (alpha folded in) + acc init ----
    @pl.when(k == 0)
    def _init():
        emb_f32 = emb_ref[...].astype(jnp.float32)
        row_ss = jnp.sum(emb_f32 * emb_f32, axis=1, keepdims=True)     # (B, 1)
        row_scale_ref[...] = alpha * lax.rsqrt(jnp.maximum(row_ss, _EPS * _EPS))
        acc_ref[0] = 0.0   # sum_c log(1 + pos_col_c)
        acc_ref[1] = 0.0   # sum_c log(1 + neg_col_c)
        acc_ref[2] = 0.0   # |unique(target)| contribution of this split

    prx = prx_ref[...]                                                 # (D, tC) native dtype
    prx_f32 = prx.astype(jnp.float32)
    ones_1d = jnp.ones((1, D), jnp.float32)
    ones_1b = jnp.ones((1, B), jnp.float32)

    # Proxy column sum-of-squares via the MXU (sublane reduction off the VPU/XLU).
    col_ss = jnp.dot(ones_1d, prx_f32 * prx_f32,
                     preferred_element_type=jnp.float32)               # (1, tC)
    col_rsqrt = lax.rsqrt(jnp.maximum(col_ss, _EPS * _EPS))

    # Raw similarities on the MXU (native-dtype operands, f32 accumulation);
    # L2 normalization AND the alpha scale fused into one post-matmul rescale.
    sim = jnp.dot(emb_ref[...], prx, preferred_element_type=jnp.float32)
    sim = sim * row_scale_ref[...] * col_rsqrt         # = alpha * cos_sim, (B, tC)

    # Boolean masks only; local iota is compared against the tile-local target
    # (no per-tile (B,tC) int add, no f32 one-hot temporaries).
    lane = lax.broadcasted_iota(jnp.int32, sim.shape, 1)
    pos_mask = lane == (tgt_ref[...] - col_base)                       # (B, tC) bool
    valid = lane < (n_classes - col_base)                              # padded-class mask
    neg_mask = jnp.logical_and(jnp.logical_not(pos_mask), valid)

    exp_ad = math.exp(alpha * delta)                                   # scalar, hoisted

    # Negative branch: a single full-tile exp (EUP); column sum on the MXU;
    # exp(alpha*delta) applied to the (1,tC) column sum, not the (B,tC) tile.
    e = jnp.exp(sim)                                                   # exp(alpha*cos)
    neg_col = jnp.dot(ones_1b, jnp.where(neg_mask, e, 0.0),
                      preferred_element_type=jnp.float32)              # (1, tC)

    # Positive branch: gather the per-row positive similarity, exponentiate
    # only a (B,1) vector (no full-tile reciprocal), scatter through the mask.
    pos_sim = jnp.sum(jnp.where(pos_mask, sim, 0.0), axis=1, keepdims=True)  # (B, 1)
    pos_exp = jnp.exp(alpha * delta - pos_sim)                               # (B, 1)
    pos_col = jnp.dot(ones_1b, jnp.where(pos_mask, pos_exp, 0.0),
                      preferred_element_type=jnp.float32)              # (1, tC)
    cnt_col = jnp.dot(ones_1b, jnp.where(pos_mask, 1.0, 0.0),
                      preferred_element_type=jnp.float32)              # (1, tC)

    # log(1 + 0) == 0, so absent / padded classes contribute nothing.
    acc_ref[0] = acc_ref[0] + jnp.sum(jnp.log(1.0 + pos_col))
    acc_ref[1] = acc_ref[1] + jnp.sum(jnp.log(1.0 + exp_ad * neg_col))
    acc_ref[2] = acc_ref[2] + jnp.sum((cnt_col > 0.0).astype(jnp.float32))

    # --- last tile of each split: emit this core's partials (lane-dense row) -
    @pl.when(k == pl.num_programs(1) - 1)
    def _finalize():
        lanes = lax.broadcasted_iota(jnp.int32, (1, 1, 128), 2)
        out_ref[...] = jnp.where(
            lanes == 0, acc_ref[0],
            jnp.where(lanes == 1, acc_ref[1],
                      jnp.where(lanes == 2, acc_ref[2], 0.0)))


def proxy_anchor_loss(embeddings, proxy, target, *, scale, margin,
                      class_tile=256, num_core_splits=2):
    """embeddings: (B, D); proxy: (D, C); target: (B,) int. Returns scalar loss."""
    B, D = embeddings.shape
    Dp, C = proxy.shape
    assert D == Dp
    assert class_tile % 128 == 0
    tgt = target.reshape(B, 1).astype(jnp.int32)

    # Don't use a wider tile than the (lane-padded) class count needs.
    class_tile = min(class_tile, max(128, ((C + 127) // 128) * 128))

    num_tiles = (C + class_tile - 1) // class_tile
    # Leading "parallel" axis: splits the class range across TensorCores
    # (2 TCs on v7x; degenerates to a cheap sequential loop on v5e/v6e).
    num_splits = num_core_splits if num_tiles >= num_core_splits else 1
    tiles_per_split = (num_tiles + num_splits - 1) // num_splits
    c_pad = num_splits * tiles_per_split * class_tile
    if c_pad != C:
        proxy = jnp.pad(proxy, ((0, 0), (0, c_pad - C)))

    # Explicit, audited VMEM budget (v5e scoped default is only 16 MiB; v7x has
    # 64 MiB physical): double-buffered inputs + live f32 temporaries + slack.
    itemsize = jnp.dtype(embeddings.dtype).itemsize
    vmem_est = (
        2 * B * D * itemsize                 # embeddings (double-buffered, resident)
        + 2 * D * class_tile * itemsize      # proxy class tile (double-buffered)
        + 2 * B * 4                          # target
        + 2 * 128 * 4                        # partial-output row
        + B * 4                              # row-scale scratch
        + 8 * B * class_tile * 4             # live (B, tC) f32/i32 temporaries
        + 3 * D * class_tile * 4             # prx_f32 / squared temporaries
    )
    vmem_limit = int(min(max(2 * vmem_est, 32 * 1024 * 1024), 64 * 1024 * 1024))

    kernel = functools.partial(
        _proxy_anchor_kernel,
        alpha=float(scale), delta=float(margin),
        n_classes=C, class_tile=class_tile, tiles_per_split=tiles_per_split,
    )

    # TODO(synk): for very large batch (B >~ 512), add a batch grid axis and
    # hoist the proxy column norms so they aren't recomputed per batch tile.
    parts = pl.pallas_call(
        kernel,
        out_shape=jax.ShapeDtypeStruct((num_splits, 1, 128), jnp.float32),
        grid_spec=pltpu.PrefetchScalarGridSpec(
            num_scalar_prefetch=0,
            grid=(num_splits, tiles_per_split),
            in_specs=[
                pl.BlockSpec((B, D), lambda p, k: (0, 0)),               # embeddings: resident
                pl.BlockSpec((D, class_tile),
                             lambda p, k: (0, p * tiles_per_split + k)),  # proxy: class tiles
                pl.BlockSpec((B, 1), lambda p, k: (0, 0)),               # target: resident
            ],
            out_specs=pl.BlockSpec((1, 1, 128), lambda p, k: (p, 0, 0)),  # per-split partials
            scratch_shapes=[
                pltpu.VMEM((B, 1), jnp.float32),   # alpha / ||embedding row||
                pltpu.SMEM((3,), jnp.float32),     # [pos_log_sum, neg_log_sum, n_unique]
            ],
        ),
        compiler_params=pltpu.CompilerParams(
            # Class-split axis is independent work (megacore on v7x); the
            # inner class axis accumulates into per-core scratch -> arbitrary.
            dimension_semantics=("parallel", "arbitrary"),
            vmem_limit_bytes=vmem_limit,
        ),
    )(embeddings, proxy, tgt)

    pos_sum = jnp.sum(parts[:, 0, 0])
    neg_sum = jnp.sum(parts[:, 0, 1])
    n_unique = jnp.sum(parts[:, 0, 2])
    return pos_sum / n_unique + neg_sum / float(C)


def _reference_loss(embeddings, proxy, target, scale, margin, n_classes):
    emb = embeddings.astype(jnp.float32)
    prx = proxy.astype(jnp.float32)
    emb_l2 = emb / jnp.maximum(jnp.linalg.norm(emb, axis=1, keepdims=True), 1e-12)
    prx_l2 = prx / jnp.maximum(jnp.linalg.norm(prx, axis=0, keepdims=True), 1e-12)
    sim = emb_l2 @ prx_l2
    pos = jax.nn.one_hot(target, n_classes, dtype=jnp.float32)
    neg = 1.0 - pos
    pos_mat = jnp.exp(-scale * (sim - margin)) * pos
    neg_mat = jnp.exp(scale * (sim + margin)) * neg
    n_unique = int(np.unique(np.asarray(target)).size)
    pos_term = jnp.sum(jnp.log(1.0 + jnp.sum(pos_mat, axis=0))) / n_unique
    neg_term = jnp.sum(jnp.log(1.0 + jnp.sum(neg_mat, axis=0))) / n_classes
    return pos_term + neg_term


if __name__ == "__main__":
    scale, margin = 32.0, 0.1
    base_key = jax.random.PRNGKey(0)

    def run_case(B, D, C):
        k_emb, k_proxy, k_tgt = jax.random.split(jax.random.fold_in(base_key, C), 3)
        embeddings = jax.random.normal(k_emb, (B, D), dtype=jnp.float32)
        target = jax.random.randint(k_tgt, (B,), 0, C, dtype=jnp.int32)
        # Deterministic kaiming_normal_(proxy, mode='fan_out'):
        # for a 2-D (D, C) tensor, fan_out = D, gain = sqrt(2) => std = sqrt(2/D).
        std = math.sqrt(2.0 / D)
        proxy = std * jax.random.normal(k_proxy, (D, C), dtype=jnp.float32)

        loss = proxy_anchor_loss(embeddings, proxy, target, scale=scale, margin=margin)
        jax.block_until_ready(loss)

        ref = _reference_loss(embeddings, proxy, target, scale, margin, C)
        err = abs(float(loss) - float(ref))
        tol = 2e-3 * abs(float(ref)) + 1e-5
        if err > tol:
            raise AssertionError(
                f"B={B} D={D} C={C}: kernel loss {float(loss)} != "
                f"reference {float(ref)} (|err|={err})")

    # Small shapes consistent with the module's forward (single class tile).
    run_case(B=8, D=32, C=16)
    # Larger class count: exercises 256-wide class tiles, the parallel split
    # axis, class padding, and cross-split partial combination.
    run_case(B=16, D=64, C=600)

    print("KERNEL_OK")
</pallas_src>

<mosaic_0001>
module attributes {stable_mosaic.version = 11 : i64} {
  func.func @_proxy_anchor_kernel(%arg0: i32, %arg1: i32, %arg2: memref<8x32xf32, #tpu.memory_space<vmem>>, %arg3: memref<32x128xf32, #tpu.memory_space<vmem>>, %arg4: memref<8x1xi32, #tpu.memory_space<vmem>>, %arg5: memref<1x1x128xf32, #tpu.memory_space<vmem>>, %arg6: memref<8x1xf32, #tpu.memory_space<vmem>>, %arg7: memref<3xf32, #tpu.memory_space<smem>>) attributes {dimension_semantics = [#tpu.dimension_semantics<parallel>, #tpu.dimension_semantics<arbitrary>], iteration_bounds = array<i64: 1, 1>, scalar_prefetch = 0 : i64, scratch_operands = 2 : i64, tpu.core_type = #tpu.core_type<tc>, window_params = [{pipeline_mode = #tpu.pipeline_mode<synchronous>, transform_indices = @transform_0, window_bounds = array<i64: 8, 32>}, {transform_indices = @transform_1, window_bounds = array<i64: 32, 128>}, {pipeline_mode = #tpu.pipeline_mode<synchronous>, transform_indices = @transform_2, window_bounds = array<i64: 8, 1>}, {transform_indices = @transform_3, window_bounds = array<i64: 1, 1, 128>}]} {
    %c1_i32 = arith.constant 1 : i32
    %0 = arith.muli %arg0, %c1_i32 : i32
    %1 = arith.addi %0, %arg1 : i32
    %c128_i32 = arith.constant 128 : i32
    %2 = arith.muli %1, %c128_i32 : i32
    %c0_i32 = arith.constant 0 : i32
    %3 = arith.cmpi eq, %arg1, %c0_i32 : i32
    %4 = arith.extui %3 : i1 to i32
    %c0_i32_0 = arith.constant 0 : i32
    %5 = arith.cmpi ne, %4, %c0_i32_0 : i32
    scf.if %5 {
      %c0_36 = arith.constant 0 : index
      %c0_37 = arith.constant 0 : index
      %88 = vector.load %arg2[%c0_36, %c0_37] : memref<8x32xf32, #tpu.memory_space<vmem>>, vector<8x32xf32>
      %89 = arith.mulf %88, %88 : vector<8x32xf32>
      %cst_38 = arith.constant dense<0.000000e+00> : vector<8xf32>
      %90 = vector.multi_reduction <add>, %89, %cst_38 [1] : vector<8x32xf32> to vector<8xf32>
      %91 = vector.shape_cast %90 : vector<8xf32> to vector<8x1xf32>
      %cst_39 = arith.constant 1.000000e-24 : f32
      %92 = vector.broadcast %cst_39 : f32 to vector<8x1xf32>
      %93 = arith.maximumf %91, %92 : vector<8x1xf32>
      %94 = math.rsqrt %93 : vector<8x1xf32>
      %cst_40 = arith.constant 3.200000e+01 : f32
      %95 = vector.broadcast %cst_40 : f32 to vector<8x1xf32>
      %96 = arith.mulf %95, %94 : vector<8x1xf32>
      %c0_41 = arith.constant 0 : index
      %c0_42 = arith.constant 0 : index
      %97 = vector.load %arg6[%c0_41, %c0_42] : memref<8x1xf32, #tpu.memory_space<vmem>>, vector<8x1xf32>
      tpu.vector_store %arg6[%c0_41, %c0_42], %96 {strides = array<i32>} : memref<8x1xf32, #tpu.memory_space<vmem>>, vector<8x1xf32>,
      %cst_43 = arith.constant 0.000000e+00 : f32
      %c0_44 = arith.constant 0 : index
      %98 = memref.load %arg7[%c0_44] : memref<3xf32, #tpu.memory_space<smem>>
      memref.store %cst_43, %arg7[%c0_44] : memref<3xf32, #tpu.memory_space<smem>>
      %cst_45 = arith.constant 0.000000e+00 : f32
      %c1_46 = arith.constant 1 : index
      %99 = memref.load %arg7[%c1_46] : memref<3xf32, #tpu.memory_space<smem>>
      memref.store %cst_45, %arg7[%c1_46] : memref<3xf32, #tpu.memory_space<smem>>
      %cst_47 = arith.constant 0.000000e+00 : f32
      %c2_48 = arith.constant 2 : index
      %100 = memref.load %arg7[%c2_48] : memref<3xf32, #tpu.memory_space<smem>>
      memref.store %cst_47, %arg7[%c2_48] : memref<3xf32, #tpu.memory_space<smem>>
    } else {
    }
    %c0 = arith.constant 0 : index
    %c0_1 = arith.constant 0 : index
    %6 = vector.load %arg3[%c0, %c0_1] : memref<32x128xf32, #tpu.memory_space<vmem>>, vector<32x128xf32>
    %cst = arith.constant 1.000000e+00 : f32
    %7 = vector.broadcast %cst : f32 to vector<1x32xf32>
    %cst_2 = arith.constant 1.000000e+00 : f32
    %8 = vector.broadcast %cst_2 : f32 to vector<1x8xf32>
    %9 = arith.mulf %6, %6 : vector<32x128xf32>
    %cst_3 = arith.constant dense<0.000000e+00> : vector<1x128xf32>
    %10 = tpu.matmul %7, %9, %cst_3 {dimension_numbers = #tpu.dot_dimension_numbers<[1], [0], [0], [1], [0, 0, 1, 1], [], []>} : vector<1x32xf32>, vector<32x128xf32>, vector<1x128xf32> -> vector<1x128xf32>
    %cst_4 = arith.constant 1.000000e-24 : f32
    %11 = vector.broadcast %cst_4 : f32 to vector<1x128xf32>
    %12 = arith.maximumf %10, %11 : vector<1x128xf32>
    %13 = math.rsqrt %12 : vector<1x128xf32>
    %c0_5 = arith.constant 0 : index
    %c0_6 = arith.constant 0 : index
    %14 = vector.load %arg2[%c0_5, %c0_6] : memref<8x32xf32, #tpu.memory_space<vmem>>, vector<8x32xf32>
    %cst_7 = arith.constant dense<0.000000e+00> : vector<8x128xf32>
    %15 = tpu.matmul %14, %6, %cst_7 {dimension_numbers = #tpu.dot_dimension_numbers<[1], [0], [0], [1], [0, 0, 1, 1], [], []>} : vector<8x32xf32>, vector<32x128xf32>, vector<8x128xf32> -> vector<8x128xf32>
    %c0_8 = arith.constant 0 : index
    %c0_9 = arith.constant 0 : index
    %16 = vector.load %arg6[%c0_8, %c0_9] : memref<8x1xf32, #tpu.memory_space<vmem>>, vector<8x1xf32>
    %17 = vector.broadcast %16 : vector<8x1xf32> to vector<8x128xf32>
    %18 = arith.mulf %15, %17 : vector<8x128xf32>
    %19 = vector.broadcast %13 : vector<1x128xf32> to vector<8x128xf32>
    %20 = arith.mulf %18, %19 : vector<8x128xf32>
    %21 = tpu.iota {dimensions = array<i32: 1>} : vector<8x128xi32>
    %c0_10 = arith.constant 0 : index
    %c0_11 = arith.constant 0 : index
    %22 = vector.load %arg4[%c0_10, %c0_11] : memref<8x1xi32, #tpu.memory_space<vmem>>, vector<8x1xi32>
    %23 = vector.broadcast %2 : i32 to vector<8x1xi32>
    %24 = arith.subi %22, %23 : vector<8x1xi32>
    %25 = vector.broadcast %24 : vector<8x1xi32> to vector<8x128xi32>
    %26 = arith.cmpi eq, %21, %25 : vector<8x128xi32>
    %c16_i32 = arith.constant 16 : i32
    %27 = arith.subi %c16_i32, %2 : i32
    %28 = vector.broadcast %27 : i32 to vector<8x128xi32>
    %29 = arith.cmpi slt, %21, %28 : vector<8x128xi32>
    %cst_12 = arith.constant dense<true> : vector<8x128xi1>
    %30 = arith.xori %26, %cst_12 : vector<8x128xi1>
    %31 = arith.andi %30, %29 : vector<8x128xi1>
    %32 = math.exp %20 : vector<8x128xf32>
    %cst_13 = arith.constant 0.000000e+00 : f32
    %33 = vector.broadcast %cst_13 : f32 to vector<8x128xf32>
    %34 = arith.select %31, %32, %33 : vector<8x128xi1>, vector<8x128xf32>
    %cst_14 = arith.constant dense<0.000000e+00> : vector<1x128xf32>
    %35 = tpu.matmul %8, %34, %cst_14 {dimension_numbers = #tpu.dot_dimension_numbers<[1], [0], [0], [1], [0, 0, 1, 1], [], []>} : vector<1x8xf32>, vector<8x128xf32>, vector<1x128xf32> -> vector<1x128xf32>
    %cst_15 = arith.constant 0.000000e+00 : f32
    %36 = vector.broadcast %cst_15 : f32 to vector<8x128xf32>
    %37 = arith.select %26, %20, %36 : vector<8x128xi1>, vector<8x128xf32>
    %cst_16 = arith.constant dense<0.000000e+00> : vector<8xf32>
    %38 = vector.multi_reduction <add>, %37, %cst_16 [1] : vector<8x128xf32> to vector<8xf32>
    %39 = vector.shape_cast %38 : vector<8xf32> to vector<8x1xf32>
    %cst_17 = arith.constant 3.200000e+00 : f32
    %40 = vector.broadcast %cst_17 : f32 to vector<8x1xf32>
    %41 = arith.subf %40, %39 : vector<8x1xf32>
    %42 = math.exp %41 : vector<8x1xf32>
    %cst_18 = arith.constant 0.000000e+00 : f32
    %43 = vector.shape_cast %42 : vector<8x1xf32> to vector<8x1xf32>
    %44 = vector.broadcast %43 : vector<8x1xf32> to vector<8x128xf32>
    %45 = vector.broadcast %cst_18 : f32 to vector<8x128xf32>
    %46 = arith.select %26, %44, %45 : vector<8x128xi1>, vector<8x128xf32>
    %cst_19 = arith.constant dense<0.000000e+00> : vector<1x128xf32>
    %47 = tpu.matmul %8, %46, %cst_19 {dimension_numbers = #tpu.dot_dimension_numbers<[1], [0], [0], [1], [0, 0, 1, 1], [], []>} : vector<1x8xf32>, vector<8x128xf32>, vector<1x128xf32> -> vector<1x128xf32>
    %cst_20 = arith.constant 1.000000e+00 : f32
    %cst_21 = arith.constant 0.000000e+00 : f32
    %48 = vector.broadcast %cst_20 : f32 to vector<8x128xf32>
    %49 = vector.broadcast %cst_21 : f32 to vector<8x128xf32>
    %50 = arith.select %26, %48, %49 : vector<8x128xi1>, vector<8x128xf32>
    %cst_22 = arith.constant dense<0.000000e+00> : vector<1x128xf32>
    %51 = tpu.matmul %8, %50, %cst_22 {dimension_numbers = #tpu.dot_dimension_numbers<[1], [0], [0], [1], [0, 0, 1, 1], [], []>} : vector<1x8xf32>, vector<8x128xf32>, vector<1x128xf32> -> vector<1x128xf32>
    %c0_23 = arith.constant 0 : index
    %52 = memref.load %arg7[%c0_23] : memref<3xf32, #tpu.memory_space<smem>>
    %cst_24 = arith.constant 1.000000e+00 : f32
    %53 = vector.broadcast %cst_24 : f32 to vector<1x128xf32>
    %54 = arith.addf %53, %47 : vector<1x128xf32>
    %55 = math.log %54 : vector<1x128xf32>
    %56 = vector.shape_cast %55 : vector<1x128xf32> to vector<1x1x128xf32>
    %cst_25 = arith.constant dense<0.000000e+00> : vector<1xf32>
    %57 = vector.multi_reduction <add>, %56, %cst_25 [1, 2] : vector<1x1x128xf32> to vector<1xf32>
    %58 = vector.shape_cast %57 : vector<1xf32> to vector<1x1x1xf32>
    %59 = vector.extract %58[0, 0, 0] : f32 from vector<1x1x1xf32>
    %60 = arith.addf %52, %59 : f32
    %c0_26 = arith.constant 0 : index
    %61 = memref.load %arg7[%c0_26] : memref<3xf32, #tpu.memory_space<smem>>
    memref.store %60, %arg7[%c0_26] : memref<3xf32, #tpu.memory_space<smem>>
    %c1 = arith.constant 1 : index
    %62 = memref.load %arg7[%c1] : memref<3xf32, #tpu.memory_space<smem>>
    %cst_27 = arith.constant 24.5325298 : f32
    %63 = vector.broadcast %cst_27 : f32 to vector<1x128xf32>
    %64 = arith.mulf %63, %35 : vector<1x128xf32>
    %cst_28 = arith.constant 1.000000e+00 : f32
    %65 = vector.broadcast %cst_28 : f32 to vector<1x128xf32>
    %66 = arith.addf %65, %64 : vector<1x128xf32>
    %67 = math.log %66 : vector<1x128xf32>
    %68 = vector.shape_cast %67 : vector<1x128xf32> to vector<1x1x128xf32>
    %cst_29 = arith.constant dense<0.000000e+00> : vector<1xf32>
    %69 = vector.multi_reduction <add>, %68, %cst_29 [1, 2] : vector<1x1x128xf32> to vector<1xf32>
    %70 = vector.shape_cast %69 : vector<1xf32> to vector<1x1x1xf32>
    %71 = vector.extract %70[0, 0, 0] : f32 from vector<1x1x1xf32>
    %72 = arith.addf %62, %71 : f32
    %c1_30 = arith.constant 1 : index
    %73 = memref.load %arg7[%c1_30] : memref<3xf32, #tpu.memory_space<smem>>
    memref.store %72, %arg7[%c1_30] : memref<3xf32, #tpu.memory_space<smem>>
    %c2 = arith.constant 2 : index
    %74 = memref.load %arg7[%c2] : memref<3xf32, #tpu.memory_space<smem>>
    %cst_31 = arith.constant 0.000000e+00 : f32
    %75 = vector.broadcast %cst_31 : f32 to vector<1x128xf32>
    %76 = arith.cmpf ogt, %51, %75 : vector<1x128xf32>
    %77 = arith.extui %76 : vector<1x128xi1> to vector<1x128xi32>
    %78 = arith.sitofp %77 : vector<1x128xi32> to vector<1x128xf32>
    %79 = vector.shape_cast %78 : vector<1x128xf32> to vector<1x1x128xf32>
    %cst_32 = arith.constant dense<0.000000e+00> : vector<1xf32>
    %80 = vector.multi_reduction <add>, %79, %cst_32 [1, 2] : vector<1x1x128xf32> to vector<1xf32>
    %81 = vector.shape_cast %80 : vector<1xf32> to vector<1x1x1xf32>
    %82 = vector.extract %81[0, 0, 0] : f32 from vector<1x1x1xf32>
    %83 = arith.addf %74, %82 : f32
    %c2_33 = arith.constant 2 : index
    %84 = memref.load %arg7[%c2_33] : memref<3xf32, #tpu.memory_space<smem>>
    memref.store %83, %arg7[%c2_33] : memref<3xf32, #tpu.memory_space<smem>>
    %c0_i32_34 = arith.constant 0 : i32
    %85 = arith.cmpi eq, %arg1, %c0_i32_34 : i32
    %86 = arith.extui %85 : i1 to i32
    %c0_i32_35 = arith.constant 0 : i32
    %87 = arith.cmpi ne, %86, %c0_i32_35 : i32
    scf.if %87 {
      %88 = tpu.iota {dimensions = array<i32: 2>} : vector<1x1x128xi32>
      %c0_i32_36 = arith.constant 0 : i32
      %89 = vector.broadcast %c0_i32_36 : i32 to vector<1x1x128xi32>
      %90 = arith.cmpi eq, %88, %89 : vector<1x1x128xi32>
      %c0_37 = arith.constant 0 : index
      %91 = memref.load %arg7[%c0_37] : memref<3xf32, #tpu.memory_space<smem>>
      %c1_i32_38 = arith.constant 1 : i32
      %92 = vector.broadcast %c1_i32_38 : i32 to vector<1x1x128xi32>
      %93 = arith.cmpi eq, %88, %92 : vector<1x1x128xi32>
      %c1_39 = arith.constant 1 : index
      %94 = memref.load %arg7[%c1_39] : memref<3xf32, #tpu.memory_space<smem>>
      %c2_i32 = arith.constant 2 : i32
      %95 = vector.broadcast %c2_i32 : i32 to vector<1x1x128xi32>
      %96 = arith.cmpi eq, %88, %95 : vector<1x1x128xi32>
      %c2_40 = arith.constant 2 : index
      %97 = memref.load %arg7[%c2_40] : memref<3xf32, #tpu.memory_space<smem>>
      %cst_41 = arith.constant 0.000000e+00 : f32
      %98 = vector.broadcast %97 : f32 to vector<1x1x128xf32>
      %99 = vector.broadcast %cst_41 : f32 to vector<1x1x128xf32>
      %100 = arith.select %96, %98, %99 : vector<1x1x128xi1>, vector<1x1x128xf32>
      %101 = vector.broadcast %94 : f32 to vector<1x1x128xf32>
      %102 = arith.select %93, %101, %100 : vector<1x1x128xi1>, vector<1x1x128xf32>
      %103 = vector.broadcast %91 : f32 to vector<1x1x128xf32>
      %104 = arith.select %90, %103, %102 : vector<1x1x128xi1>, vector<1x1x128xf32>
      %c0_42 = arith.constant 0 : index
      %c0_43 = arith.constant 0 : index
      %c0_44 = arith.constant 0 : index
      %105 = vector.load %arg5[%c0_42, %c0_43, %c0_44] : memref<1x1x128xf32, #tpu.memory_space<vmem>>, vector<1x1x128xf32>
      tpu.vector_store %arg5[%c0_42, %c0_43, %c0_44], %104 {strides = array<i32>} : memref<1x1x128xf32, #tpu.memory_space<vmem>>, vector<1x1x128xf32>,
    } else {
    }
    return
  }
  func.func @transform_0(%arg0: i32, %arg1: i32) -> (i32, i32) {
    %c0_i32 = arith.constant 0 : i32
    %c0_i32_0 = arith.constant 0 : i32
    %c0_i32_1 = arith.constant 0 : i32
    return %c0_i32, %c0_i32_0 : i32, i32
  }
  func.func @transform_1(%arg0: i32, %arg1: i32) -> (i32, i32) {
    %c1_i32 = arith.constant 1 : i32
    %0 = arith.muli %arg0, %c1_i32 : i32
    %1 = arith.addi %0, %arg1 : i32
    %c0_i32 = arith.constant 0 : i32
    %c0_i32_0 = arith.constant 0 : i32
    return %c0_i32, %1 : i32, i32
  }
  func.func @transform_2(%arg0: i32, %arg1: i32) -> (i32, i32) {
    %c0_i32 = arith.constant 0 : i32
    %c0_i32_0 = arith.constant 0 : i32
    %c0_i32_1 = arith.constant 0 : i32
    return %c0_i32, %c0_i32_0 : i32, i32
  }
  func.func @transform_3(%arg0: i32, %arg1: i32) -> (i32, i32, i32) {
    %c0_i32 = arith.constant 0 : i32
    %c0_i32_0 = arith.constant 0 : i32
    %c0_i32_1 = arith.constant 0 : i32
    return %arg0, %c0_i32, %c0_i32_0 : i32, i32, i32
  }
}

</mosaic_0001>

<llo_original>
// kernel: tpu_custom_call.1
$region0: #{tpu_custom_call.1}
  #allocation0 [shape = 'u32[]', space=smem, size = 0x4, offset = 0x4, fixed_abs, tag = 'smem constant byte address 0x4 - core index']
  #allocation1 [shape = 'u32[144,128]{1,0:T(1,128)}', space=vmem, size = 0x12000, scoped, tag = 'internal scratch']
  #allocation2 [shape = 'f32[8,1]{1,0:T(8,128)}', space=vmem, size = 0x1000, scoped, tag = 'scratch operand']
  #allocation3 [shape = 'f32[3]{0:T(128)}', space=smem, size = 0x200, scoped, tag = 'scratch operand']
  %s0 = inlined_call_operand.vmem [shape: f32[8,32], index: 0, kind: input, shape index: {}]
  %s1 = inlined_call_operand.hbm [shape: f32[32,128], index: 1, kind: input, shape index: {}]
  %s2 = inlined_call_operand.vmem [shape: s32[8,1], index: 2, kind: input, shape index: {}]
  %s3 = inlined_call_operand.hbm [shape: f32[1,1,128], index: 3, kind: output, shape index: {}]
  %s4 = sld [smem:[#allocation0]]
  $region34: #{tpu_custom_call.1} parent=0
    _
  %s6 = ssub.s32 1, %s4
  %s7 = scalar_select 0, %s6, %s4
  $region1: #{tpu_custom_call.1} parent=0
    #allocation4 [shape = 'u8[16384]{0}', space=vmem, size = 0x4000, scoped, tag = 'input window, operand 1, single buffered']
    #allocation5 [shape = 's32[1]{0}', space=sflag, size = 0x4, scoped, tag = 'scoped memory for tpu_custom_call.1']
    #allocation6 [shape = 's32[1]{0}', space=sflag, size = 0x4, scoped, tag = 'scoped memory for tpu_custom_call.1']
    #allocation7 [shape = 'u8[512]{0}', space=vmem, size = 0x400, scoped, tag = 'output window, operand 0, single buffered']
    %8 = vsyncpa [#allocation5], 0
    %9 = vsyncpa [#allocation6], 0
    // Predicated region
    $region2: #{tpu_custom_call.1} parent=1 // pred_check
      _
    $region3: #{tpu_custom_call.1} parent=1 // pred_check_branch
      %11 = sbr.rel (0) target = $region5
    $region4: #{tpu_custom_call.1} parent=1 // pred_region
      _
    $region5: #{tpu_custom_call.1} parent=1 // pred_fallthru
      _
    // Predicated region
    $region6: #{tpu_custom_call.1} parent=1 // pred_check
      _
    $region7: #{tpu_custom_call.1} parent=1 // pred_check_branch
      %13 = sbr.rel (0) target = $region9
    $region8: #{tpu_custom_call.1} parent=1 // pred_region
      %s14 = sadd.s32 0, 0
      %s16 = ssub.s32 512, 512
      %17 = vsyncadd [#allocation5], %s16
      %s18 = smul.addr %s14, 128
      %s19 = scalar_lea.hbm %s1, %s18
      %s20 = sshll.u32 [#allocation4], 4
      %s21 = int_to_ptr.vmem [resolvable:$true] %s20
      %26 = dma.hbm_to_vmem [thread:$0]  %s19, 512, %s21, [#allocation5], 128, 128, 8
    $region9: #{tpu_custom_call.1} parent=1 // pred_fallthru
      _
    // Predicated region
    $region10: #{tpu_custom_call.1} parent=1 // pred_check
      _
    $region11: #{tpu_custom_call.1} parent=1 // pred_check_branch
      %28 = sbr.rel (0) target = $region13
    $region12: #{tpu_custom_call.1} parent=1 // pred_region
      _
    $region13: #{tpu_custom_call.1} parent=1 // pred_fallthru
      _
    // Predicated region
    $region14: #{tpu_custom_call.1} parent=1 // pred_check
      _
    $region15: #{tpu_custom_call.1} parent=1 // pred_check_branch
      %30 = sbr.rel (0) target = $region17
    $region16: #{tpu_custom_call.1} parent=1 // pred_region
      %31 = dma.done [#allocation5], 512
    $region17: #{tpu_custom_call.1} parent=1 // pred_fallthru
      _
    %s32 = sadd.s32 0, 0
    %s33 = sadd.s32 0, 0
    %s34 = smul.u32 %s33, 128
    %p35 = scmp.eq.s32.totalorder 0, 0
    // Predicated region
    $region18: #{tpu_custom_call.1} parent=1 // pred_check
      %p36 = pneg %p35
    $region19: #{tpu_custom_call.1} parent=1 // pred_check_branch
      %38 = sbr.rel (%p36) target = $region21
    $region20: #{tpu_custom_call.1} parent=1 // pred_region
      %v39 = vld [vmem:[%s0] sm:$0xff]
      %v40 = vmul.f32 %v39, %v39
      %vm41 = vcmask 261120
      %v42 = vsel %vm41, %v40, 0.0
      %43 = vadd.xlane.f32.xlu0 %v42
      %v44 = vpop.xlane.xlu0 %43
      %v45 = vmax.f32 %v44, 1e-24
      %v46 = vrsqrt.pop %v45
      %v47 = vmul.f32 %v46, 32.0
      %vm48 = vcmask 7168
      %49 = vst.msk [vmem:[#allocation2] sm:$0xff] %vm48, %v47
      %s50 = scalar_lea.smem [#allocation3], 0
      %51 = sst [smem:[%s50]] 0.0
      %s52 = scalar_lea.smem [#allocation3], 1
      %53 = sst [smem:[%s52]] 0.0
      %s54 = scalar_lea.smem [#allocation3], 2
      %55 = sst [smem:[%s54]] 0.0
    $region21: #{tpu_custom_call.1} parent=1 // pred_fallthru
      _
    %v56 = vld [vmem:[#allocation4] sm:$0xff]
    %v57 = vld [vmem:[#allocation4 + $0x8] sm:$0xff]
    %v58 = vld [vmem:[#allocation4 + $0x10] sm:$0xff]
    %v59 = vld [vmem:[#allocation4 + $0x18] sm:$0xff]
    %v60 = vmul.f32 %v56, %v56
    %v61 = vmul.f32 %v57, %v57
    %v62 = vmul.f32 %v58, %v58
    %v63 = vmul.f32 %v59, %v59
    %vm64 = vcmask 261120
    %v66 = vsel %vm64, 1.0, 0
    %68 = vmatprep.subr.mxu0 0.0
    %69 = vmatpush1.msra.mxu0 %v60
    %70 = vmatprep.subr.mxu0 0.0
    %71 = vmatpush1.msra.mxu0 %v61
    %72 = vmatprep.subr.mxu0 0.0
    %73 = vmatpush1.msra.mxu0 %v62
    %74 = vmatprep.subr.mxu0 0.0
    %75 = vmatpush1.msra.mxu0 %v63
    %76 = vmatprep.subr.mxu0 0.0
    %77 = vmatpush1.msra.mxu0 0.0
    %78 = vmatprep.subr.mxu0 0.0
    %79 = vmatpush1.msra.mxu0 0.0
    %80 = vmatprep.subr.mxu0 0.0
    %81 = vmatpush1.msra.mxu0 0.0
    %82 = vmatprep.subr.mxu0 0.0
    %83 = vmatpush1.msra.mxu0 0.0
    %84 = vmatprep.subr.mxu0 0.0
    %85 = vmatpush1.msra.mxu0 0.0
    %86 = vmatprep.subr.mxu0 0.0
    %87 = vmatpush1.msra.mxu0 0.0
    %88 = vmatprep.subr.mxu0 0.0
    %89 = vmatpush1.msra.mxu0 0.0
    %90 = vmatprep.subr.mxu0 0.0
    %91 = vmatpush1.msra.mxu0 0.0
    %92 = vmatprep.subr.mxu0 0.0
    %93 = vmatpush1.msra.mxu0 0.0
    %94 = vmatprep.subr.mxu0 0.0
    %95 = vmatpush1.msra.mxu0 0.0
    %96 = vmatprep.subr.mxu0 0.0
    %97 = vmatpush1.msra.mxu0 0.0
    %98 = vmatprep.subr.mxu0 0.0
    %99 = vmatpush1.msra.mxu0 0.0
    %100 = vmatprep.subr.mxu0 0.0
    %101 = vmatpush1.msra.mxu0 0.0
    %102 = vmatprep.subr.mxu0 0.0
    %103 = vmatpush1.msra.mxu0 0.0
    %104 = vmatprep.subr.mxu0 0.0
    %105 = vmatpush1.msra.mxu0 0.0
    %106 = vmatprep.subr.mxu0 0.0
    %107 = vmatpush1.msra.mxu0 0.0
    %108 = vmatprep.subr.mxu0 0.0
    %109 = vmatpush1.msra.mxu0 0.0
    %110 = vmatprep.subr.mxu0 0.0
    %111 = vmatpush1.msra.mxu0 0.0
    %112 = vmatprep.subr.mxu0 0.0
    %113 = vmatpush1.msra.mxu0 0.0
    %114 = vmatprep.subr.mxu0 0.0
    %115 = vmatpush1.msra.mxu0 0.0
    %116 = vmatprep.subr.mxu0 0.0
    %117 = vmatpush1.msra.mxu0 0.0
    %118 = vmatprep.subr.mxu0 0.0
    %119 = vmatpush1.msra.mxu0 0.0
    %120 = vmatprep.subr.mxu0 0.0
    %121 = vmatpush1.msra.mxu0 0.0
    %122 = vmatprep.subr.mxu0 0.0
    %123 = vmatpush1.msra.mxu0 0.0
    %124 = vmatprep.subr.mxu0 0.0
    %125 = vmatpush1.msra.mxu0 0.0
    %126 = vmatprep.subr.mxu0 0.0
    %127 = vmatpush1.msra.mxu0 0.0
    %128 = vmatprep.subr.mxu0 0.0
    %129 = vmatpush1.msra.mxu0 0.0
    %130 = vmatprep.subr.mxu0 0.0
    %131 = vmatpush1.msra.mxu0 0.0
    %132 = vmatprep.mubr.f32.mxu0 0.0
    %133 = vmatmul.mubr.f32.gmra.mrb[0].mxu0 %v66
    %v134 = vpop.f32.mrb[0].mxu0
    %v135 = vadd.f32 0.0, %v134
    %v136 = vpop.f32.mrb[0].mxu0
    %137 = vdwg.mxu0
    %v138 = vmax.f32 %v135, 1e-24
    %v139 = vrsqrt.pop %v138
    %v140 = vld [vmem:[%s0] sm:$0xff]
    %v142 = vsel %vm64, %v140, 0
    %144 = vmatprep.subr.mxu0 0.0
    %145 = vmatpush1.msra.mxu0 %v56
    %146 = vmatprep.subr.mxu0 0.0
    %147 = vmatpush1.msra.mxu0 %v57
    %148 = vmatprep.subr.mxu0 0.0
    %149 = vmatpush1.msra.mxu0 %v58
    %150 = vmatprep.subr.mxu0 0.0
    %151 = vmatpush1.msra.mxu0 %v59
    %152 = vmatprep.subr.mxu0 0.0
    %153 = vmatpush1.msra.mxu0 0.0
    %154 = vmatprep.subr.mxu0 0.0
    %155 = vmatpush1.msra.mxu0 0.0
    %156 = vmatprep.subr.mxu0 0.0
    %157 = vmatpush1.msra.mxu0 0.0
    %158 = vmatprep.subr.mxu0 0.0
    %159 = vmatpush1.msra.mxu0 0.0
    %160 = vmatprep.subr.mxu0 0.0
    %161 = vmatpush1.msra.mxu0 0.0
    %162 = vmatprep.subr.mxu0 0.0
    %163 = vmatpush1.msra.mxu0 0.0
    %164 = vmatprep.subr.mxu0 0.0
    %165 = vmatpush1.msra.mxu0 0.0
    %166 = vmatprep.subr.mxu0 0.0
    %167 = vmatpush1.msra.mxu0 0.0
    %168 = vmatprep.subr.mxu0 0.0
    %169 = vmatpush1.msra.mxu0 0.0
    %170 = vmatprep.subr.mxu0 0.0
    %171 = vmatpush1.msra.mxu0 0.0
    %172 = vmatprep.subr.mxu0 0.0
    %173 = vmatpush1.msra.mxu0 0.0
    %174 = vmatprep.subr.mxu0 0.0
    %175 = vmatpush1.msra.mxu0 0.0
    %176 = vmatprep.subr.mxu0 0.0
    %177 = vmatpush1.msra.mxu0 0.0
    %178 = vmatprep.subr.mxu0 0.0
    %179 = vmatpush1.msra.mxu0 0.0
    %180 = vmatprep.subr.mxu0 0.0
    %181 = vmatpush1.msra.mxu0 0.0
    %182 = vmatprep.subr.mxu0 0.0
    %183 = vmatpush1.msra.mxu0 0.0
    %184 = vmatprep.subr.mxu0 0.0
    %185 = vmatpush1.msra.mxu0 0.0
    %186 = vmatprep.subr.mxu0 0.0
    %187 = vmatpush1.msra.mxu0 0.0
    %188 = vmatprep.subr.mxu0 0.0
    %189 = vmatpush1.msra.mxu0 0.0
    %190 = vmatprep.subr.mxu0 0.0
    %191 = vmatpush1.msra.mxu0 0.0
    %192 = vmatprep.subr.mxu0 0.0
    %193 = vmatpush1.msra.mxu0 0.0
    %194 = vmatprep.subr.mxu0 0.0
    %195 = vmatpush1.msra.mxu0 0.0
    %196 = vmatprep.subr.mxu0 0.0
    %197 = vmatpush1.msra.mxu0 0.0
    %198 = vmatprep.subr.mxu0 0.0
    %199 = vmatpush1.msra.mxu0 0.0
    %200 = vmatprep.subr.mxu0 0.0
    %201 = vmatpush1.msra.mxu0 0.0
    %202 = vmatprep.subr.mxu0 0.0
    %203 = vmatpush1.msra.mxu0 0.0
    %204 = vmatprep.subr.mxu0 0.0
    %205 = vmatpush1.msra.mxu0 0.0
    %206 = vmatprep.subr.mxu0 0.0
    %207 = vmatpush1.msra.mxu0 0.0
    %208 = vmatprep.mubr.f32.mxu0 0.0
    %209 = vmatmul.mubr.f32.gmra.mrb[0].mxu0 %v142
    %v210 = vpop.f32.mrb[0].mxu0
    %v211 = vadd.f32 0.0, %v210
    %v212 = vpop.f32.mrb[0].mxu0
    %213 = vdwg.mxu0
    %v214 = vld [vmem:[#allocation2] sm:$0xff]
    %216 = vset.pattern.permute.xlu0 0
    %217 = vperm.xlu0 %216, %v214
    %v218 = vpop.permute.xlu0 %217
    %v220 = vmul.f32 %v211, %v218
    %v221 = vlaneseq
    %v222 = vshrl.u32 %v221, 7
    %v223 = vsub.s32 0, %v222
    %v224 = vrot.slane %v139, %v223
    %v225 = vmul.f32 %v220, %v224
    %v226 = vlaneseq
    %v227 = vand.u32 %v226, 127
    %v228 = vld [vmem:[%s2] sm:$0xff]
    %v229 = vstv %s34
    %v230 = vsub.s32 %v228, %v229
    %231 = vset.pattern.permute.xlu0 0
    %232 = vperm.xlu0 %231, %v230
    %v233 = vpop.permute.xlu0 %232
    %vm234 = vcmp.eq.s32.totalorder %v227, %v233
    %s235 = ssub.s32 16, %s34
    %v236 = vstv %s235
    %vm237 = vcmp.lt.s32.totalorder %v227, %v236
    %vm238 = vmxor %vm234, 1
    %vm239 = vmand %vm238, %vm237
    %v240 = vmul.f32 %v225, 1.442695
    %v241 = vpow.pop %v240
    %v242 = vsel %vm239, %v241, 0.0
    %vm243 = vcmask 64512
    %v244 = vsel %vm243, 1.0, 0
    %246 = vmatprep.subr.mxu0 0.0
    %247 = vmatpush1.msra.mxu0 %v242
    %248 = vmatprep.subr.mxu0 0.0
    %249 = vmatpush1.msra.mxu0 0.0
    %250 = vmatprep.subr.mxu0 0.0
    %251 = vmatpush1.msra.mxu0 0.0
    %252 = vmatprep.subr.mxu0 0.0
    %253 = vmatpush1.msra.mxu0 0.0
    %254 = vmatprep.subr.mxu0 0.0
    %255 = vmatpush1.msra.mxu0 0.0
    %256 = vmatprep.subr.mxu0 0.0
    %257 = vmatpush1.msra.mxu0 0.0
    %258 = vmatprep.subr.mxu0 0.0
    %259 = vmatpush1.msra.mxu0 0.0
    %260 = vmatprep.subr.mxu0 0.0
    %261 = vmatpush1.msra.mxu0 0.0
    %262 = vmatprep.subr.mxu0 0.0
    %263 = vmatpush1.msra.mxu0 0.0
    %264 = vmatprep.subr.mxu0 0.0
    %265 = vmatpush1.msra.mxu0 0.0
    %266 = vmatprep.subr.mxu0 0.0
    %267 = vmatpush1.msra.mxu0 0.0
    %268 = vmatprep.subr.mxu0 0.0
    %269 = vmatpush1.msra.mxu0 0.0
    %270 = vmatprep.subr.mxu0 0.0
    %271 = vmatpush1.msra.mxu0 0.0
    %272 = vmatprep.subr.mxu0 0.0
    %273 = vmatpush1.msra.mxu0 0.0
    %274 = vmatprep.subr.mxu0 0.0
    %275 = vmatpush1.msra.mxu0 0.0
    %276 = vmatprep.subr.mxu0 0.0
    %277 = vmatpush1.msra.mxu0 0.0
    %278 = vmatprep.subr.mxu0 0.0
    %279 = vmatpush1.msra.mxu0 0.0
    %280 = vmatprep.subr.mxu0 0.0
    %281 = vmatpush1.msra.mxu0 0.0
    %282 = vmatprep.subr.mxu0 0.0
    %283 = vmatpush1.msra.mxu0 0.0
    %284 = vmatprep.subr.mxu0 0.0
    %285 = vmatpush1.msra.mxu0 0.0
    %286 = vmatprep.subr.mxu0 0.0
    %287 = vmatpush1.msra.mxu0 0.0
    %288 = vmatprep.subr.mxu0 0.0
    %289 = vmatpush1.msra.mxu0 0.0
    %290 = vmatprep.subr.mxu0 0.0
    %291 = vmatpush1.msra.mxu0 0.0
    %292 = vmatprep.subr.mxu0 0.0
    %293 = vmatpush1.msra.mxu0 0.0
    %294 = vmatprep.subr.mxu0 0.0
    %295 = vmatpush1.msra.mxu0 0.0
    %296 = vmatprep.subr.mxu0 0.0
    %297 = vmatpush1.msra.mxu0 0.0
    %298 = vmatprep.subr.mxu0 0.0
    %299 = vmatpush1.msra.mxu0 0.0
    %300 = vmatprep.subr.mxu0 0.0
    %301 = vmatpush1.msra.mxu0 0.0
    %302 = vmatprep.subr.mxu0 0.0
    %303 = vmatpush1.msra.mxu0 0.0
    %304 = vmatprep.subr.mxu0 0.0
    %305 = vmatpush1.msra.mxu0 0.0
    %306 = vmatprep.subr.mxu0 0.0
    %307 = vmatpush1.msra.mxu0 0.0
    %308 = vmatprep.subr.mxu0 0.0
    %309 = vmatpush1.msra.mxu0 0.0
    %310 = vmatprep.mubr.f32.mxu0 0.0
    %311 = vmatmul.mubr.f32.gmra.mrb[0].mxu0 %v244
    %v312 = vpop.f32.mrb[0].mxu0
    %v313 = vadd.f32 0.0, %v312
    %v314 = vpop.f32.mrb[0].mxu0
    %315 = vdwg.mxu0
    %v316 = vsel %vm234, %v225, 0.0
    %317 = vadd.xlane.f32.xlu0 %v316
    %v318 = vpop.xlane.xlu0 %317
    %v319 = vsub.f32 3.2, %v318
    %v320 = vmul.f32 %v319, 1.442695
    %v321 = vpow.pop %v320
    %v322 = vsel %vm234, %v321, 0.0
    %v323 = vsel %vm234, 1.0, 0.0
    %324 = vmatprep.subr.mxu0 0.0
    %325 = vmatpush1.msra.mxu0 %v323
    %326 = vmatprep.subr.mxu0 0.0
    %327 = vmatpush1.msra.mxu0 0.0
    %328 = vmatprep.subr.mxu0 0.0
    %329 = vmatpush1.msra.mxu0 0.0
    %330 = vmatprep.subr.mxu0 0.0
    %331 = vmatpush1.msra.mxu0 0.0
    %332 = vmatprep.subr.mxu0 0.0
    %333 = vmatpush1.msra.mxu0 0.0
    %334 = vmatprep.subr.mxu0 0.0
    %335 = vmatpush1.msra.mxu0 0.0
    %336 = vmatprep.subr.mxu0 0.0
    %337 = vmatpush1.msra.mxu0 0.0
    %338 = vmatprep.subr.mxu0 0.0
    %339 = vmatpush1.msra.mxu0 0.0
    %340 = vmatprep.subr.mxu0 0.0
    %341 = vmatpush1.msra.mxu0 0.0
    %342 = vmatprep.subr.mxu0 0.0
    %343 = vmatpush1.msra.mxu0 0.0
    %344 = vmatprep.subr.mxu0 0.0
    %345 = vmatpush1.msra.mxu0 0.0
    %346 = vmatprep.subr.mxu0 0.0
    %347 = vmatpush1.msra.mxu0 0.0
    %348 = vmatprep.subr.mxu0 0.0
    %349 = vmatpush1.msra.mxu0 0.0
    %350 = vmatprep.subr.mxu0 0.0
    %351 = vmatpush1.msra.mxu0 0.0
    %352 = vmatprep.subr.mxu0 0.0
    %353 = vmatpush1.msra.mxu0 0.0
    %354 = vmatprep.subr.mxu0 0.0
    %355 = vmatpush1.msra.mxu0 0.0
    %356 = vmatprep.subr.mxu0 0.0
    %357 = vmatpush1.msra.mxu0 0.0
    %358 = vmatprep.subr.mxu0 0.0
    %359 = vmatpush1.msra.mxu0 0.0
    %360 = vmatprep.subr.mxu0 0.0
    %361 = vmatpush1.msra.mxu0 0.0
    %362 = vmatprep.subr.mxu0 0.0
    %363 = vmatpush1.msra.mxu0 0.0
    %364 = vmatprep.subr.mxu0 0.0
    %365 = vmatpush1.msra.mxu0 0.0
    %366 = vmatprep.subr.mxu0 0.0
    %367 = vmatpush1.msra.mxu0 0.0
    %368 = vmatprep.subr.mxu0 0.0
    %369 = vmatpush1.msra.mxu0 0.0
    %370 = vmatprep.subr.mxu0 0.0
    %371 = vmatpush1.msra.mxu0 0.0
    %372 = vmatprep.subr.mxu0 0.0
    %373 = vmatpush1.msra.mxu0 0.0
    %374 = vmatprep.subr.mxu0 0.0
    %375 = vmatpush1.msra.mxu0 0.0
    %376 = vmatprep.subr.mxu0 0.0
    %377 = vmatpush1.msra.mxu0 0.0
    %378 = vmatprep.subr.mxu0 0.0
    %379 = vmatpush1.msra.mxu0 0.0
    %380 = vmatprep.subr.mxu0 0.0
    %381 = vmatpush1.msra.mxu0 0.0
    %382 = vmatprep.subr.mxu0 0.0
    %383 = vmatpush1.msra.mxu0 0.0
    %384 = vmatprep.subr.mxu0 0.0
    %385 = vmatpush1.msra.mxu0 0.0
    %386 = vmatprep.subr.mxu0 0.0
    %387 = vmatpush1.msra.mxu0 0.0
    %388 = vmatprep.mubr.f32.mxu0 0.0
    %389 = vmatmul.mubr.f32.gmra.mrb[0].mxu0 %v244
    %v390 = vpop.f32.mrb[0].mxu0
    %v391 = vadd.f32 0.0, %v390
    %v392 = vpop.f32.mrb[0].mxu0
    %393 = vdwg.mxu0
    %s394 = sld [smem:[#allocation3]]
    %395 = vmatprep.subr.mxu0 0.0
    %396 = vmatpush1.msra.mxu0 %v322
    %397 = vmatprep.subr.mxu0 0.0
    %398 = vmatpush1.msra.mxu0 0.0
    %399 = vmatprep.subr.mxu0 0.0
    %400 = vmatpush1.msra.mxu0 0.0
    %401 = vmatprep.subr.mxu0 0.0
    %402 = vmatpush1.msra.mxu0 0.0
    %403 = vmatprep.subr.mxu0 0.0
    %404 = vmatpush1.msra.mxu0 0.0
    %405 = vmatprep.subr.mxu0 0.0
    %406 = vmatpush1.msra.mxu0 0.0
    %407 = vmatprep.subr.mxu0 0.0
    %408 = vmatpush1.msra.mxu0 0.0
    %409 = vmatprep.subr.mxu0 0.0
    %410 = vmatpush1.msra.mxu0 0.0
    %411 = vmatprep.subr.mxu0 0.0
    %412 = vmatpush1.msra.mxu0 0.0
    %413 = vmatprep.subr.mxu0 0.0
    %414 = vmatpush1.msra.mxu0 0.0
    %415 = vmatprep.subr.mxu0 0.0
    %416 = vmatpush1.msra.mxu0 0.0
    %417 = vmatprep.subr.mxu0 0.0
    %418 = vmatpush1.msra.mxu0 0.0
    %419 = vmatprep.subr.mxu0 0.0
    %420 = vmatpush1.msra.mxu0 0.0
    %421 = vmatprep.subr.mxu0 0.0
    %422 = vmatpush1.msra.mxu0 0.0
    %423 = vmatprep.subr.mxu0 0.0
    %424 = vmatpush1.msra.mxu0 0.0
    %425 = vmatprep.subr.mxu0 0.0
    %426 = vmatpush1.msra.mxu0 0.0
    %427 = vmatprep.subr.mxu0 0.0
    %428 = vmatpush1.msra.mxu0 0.0
    %429 = vmatprep.subr.mxu0 0.0
    %430 = vmatpush1.msra.mxu0 0.0
    %431 = vmatprep.subr.mxu0 0.0
    %432 = vmatpush1.msra.mxu0 0.0
    %433 = vmatprep.subr.mxu0 0.0
    %434 = vmatpush1.msra.mxu0 0.0
    %435 = vmatprep.subr.mxu0 0.0
    %436 = vmatpush1.msra.mxu0 0.0
    %437 = vmatprep.subr.mxu0 0.0
    %438 = vmatpush1.msra.mxu0 0.0
    %439 = vmatprep.subr.mxu0 0.0
    %440 = vmatpush1.msra.mxu0 0.0
    %441 = vmatprep.subr.mxu0 0.0
    %442 = vmatpush1.msra.mxu0 0.0
    %443 = vmatprep.subr.mxu0 0.0
    %444 = vmatpush1.msra.mxu0 0.0
    %445 = vmatprep.subr.mxu0 0.0
    %446 = vmatpush1.msra.mxu0 0.0
    %447 = vmatprep.subr.mxu0 0.0
    %448 = vmatpush1.msra.mxu0 0.0
    %449 = vmatprep.subr.mxu0 0.0
    %450 = vmatpush1.msra.mxu0 0.0
    %451 = vmatprep.subr.mxu0 0.0
    %452 = vmatpush1.msra.mxu0 0.0
    %453 = vmatprep.subr.mxu0 0.0
    %454 = vmatpush1.msra.mxu0 0.0
    %455 = vmatprep.subr.mxu0 0.0
    %456 = vmatpush1.msra.mxu0 0.0
    %457 = vmatprep.subr.mxu0 0.0
    %458 = vmatpush1.msra.mxu0 0.0
    %459 = vmatprep.mubr.f32.mxu0 0.0
    %460 = vmatmul.mubr.f32.gmra.mrb[0].mxu0 %v244
    %v461 = vpop.f32.mrb[0].mxu0
    %v462 = vadd.f32 1.0, %v461
    %v463 = vpop.f32.mrb[0].mxu0
    %464 = vdwg.mxu0
    %v465 = vlog2.pop %v462
    %v466 = vmul.f32 %v465, 0.6931472
    %vm467 = vcmask 1040384
    %v468 = vsel %vm467, %v466, 0.0
    %469 = vadd.xlane.f32.xlu0 %v468
    %v470 = vpop.xlane.xlu0 %469
    %v471 = vrot.slane %v470, 4
    %v472 = vadd.f32 %v470, %v471
    %v473 = vrot.slane %v472, 2
    %v474 = vadd.f32 %v472, %v473
    %v475 = vrot.slane %v474, 1
    %v476 = vadd.f32 %v474, %v475
    %s477 = vtos %v476
    %s478 = sadd.f32 %s394, %s477
    %s479 = scalar_lea.smem [#allocation3], 0
    %480 = sst [smem:[%s479]] %s478
    %s481 = sld [smem:[#allocation3 + $0x1]]
    %v482 = vmul.f32 %v313, 24.53253
    %v483 = vadd.f32 %v482, 1.0
    %v484 = vlog2.pop %v483
    %v485 = vmul.f32 %v484, 0.6931472
    %v486 = vsel %vm467, %v485, 0.0
    %487 = vadd.xlane.f32.xlu0 %v486
    %v488 = vpop.xlane.xlu0 %487
    %v489 = vrot.slane %v488, 4
    %v490 = vadd.f32 %v488, %v489
    %v491 = vrot.slane %v490, 2
    %v492 = vadd.f32 %v490, %v491
    %v493 = vrot.slane %v492, 1
    %v494 = vadd.f32 %v492, %v493
    %s495 = vtos %v494
    %s496 = sadd.f32 %s481, %s495
    %s497 = scalar_lea.smem [#allocation3], 1
    %498 = sst [smem:[%s497]] %s496
    %s499 = sld [smem:[#allocation3 + $0x2]]
    %vm500 = vcmp.gt.f32.partialorder %v391, 0.0
    %v501 = vsel %vm500, 1, 0
    %v502 = vcvt.s32.f32 %v501
    %v503 = vsel %vm467, %v502, 0.0
    %504 = vadd.xlane.f32.xlu0 %v503
    %v505 = vpop.xlane.xlu0 %504
    %v506 = vrot.slane %v505, 4
    %v507 = vadd.f32 %v505, %v506
    %v508 = vrot.slane %v507, 2
    %v509 = vadd.f32 %v507, %v508
    %v510 = vrot.slane %v509, 1
    %v511 = vadd.f32 %v509, %v510
    %s512 = vtos %v511
    %s513 = sadd.f32 %s499, %s512
    %s514 = scalar_lea.smem [#allocation3], 2
    %515 = sst [smem:[%s514]] %s513
    // Predicated region
    $region22: #{tpu_custom_call.1} parent=1 // pred_check
      %p516 = pneg %p35
    $region23: #{tpu_custom_call.1} parent=1 // pred_check_branch
      %518 = sbr.rel (%p516) target = $region25
    $region24: #{tpu_custom_call.1} parent=1 // pred_region
      %vm519 = vcmp.eq.s32.totalorder %v227, 0
      %s520 = sld [smem:[#allocation3]]
      %vm521 = vcmp.eq.s32.totalorder %v227, 1
      %s522 = sld [smem:[#allocation3 + $0x1]]
      %vm523 = vcmp.eq.s32.totalorder %v227, 2
      %s524 = sld [smem:[#allocation3 + $0x2]]
      %v525 = vstv %s524
      %v526 = vsel %vm523, %v525, 0.0
      %v527 = vstv %s522
      %v528 = vsel %vm521, %v527, %v526
      %v529 = vstv %s520
      %v530 = vsel %vm519, %v529, %v528
      %531 = vst [vmem:[#allocation7] sm:$0x1] %v530
    $region25: #{tpu_custom_call.1} parent=1 // pred_fallthru
      _
    // Predicated region
    $region26: #{tpu_custom_call.1} parent=1 // pred_check
      _
    $region27: #{tpu_custom_call.1} parent=1 // pred_check_branch
      %533 = sbr.rel (0) target = $region29
    $region28: #{tpu_custom_call.1} parent=1 // pred_region
      %s535 = ssub.s32 16, 16
      %536 = vsyncadd [#allocation6], %s535
      %s538 = sshll.u32 [#allocation7], 4
      %s539 = int_to_ptr.vmem [resolvable:$true] %s538
      %541 = dma.vmem_to_hbm [thread:$0]  %s539, 16, %s3, [#allocation6]
    $region29: #{tpu_custom_call.1} parent=1 // pred_fallthru
      _
    // Predicated region
    $region30: #{tpu_custom_call.1} parent=1 // pred_check
      _
    $region31: #{tpu_custom_call.1} parent=1 // pred_check_branch
      %543 = sbr.rel (0) target = $region33
    $region32: #{tpu_custom_call.1} parent=1 // pred_region
      %544 = dma.done [#allocation6], 16
    $region33: #{tpu_custom_call.1} parent=1 // pred_fallthru
      _
    %545 = vsyncpa [#allocation5], 1
    %546 = vsyncpa [#allocation6], 1

</llo_original>
